<compile_context>
chip_gen: v6e
topology: v6e:2x2x1
jax: 0.10.0
libtpu: 0.0.40
codegen_flags: <defaults>
</compile_context>

<pallas_src>
import functools
import math

import jax
import jax.numpy as jnp
from jax import lax
from jax.experimental import pallas as pl
from jax.experimental.pallas import tpu as pltpu


def _largest_divisor_tile(n, target):
    """Largest multiple of 8 that divides n and is <= target (else n itself)."""
    t = min(n, target)
    t -= t % 8
    while t >= 8:
        if n % t == 0:
            return t
        t -= 8
    return n


# ---------------------------------------------------------------------------
# Kernel 1: full-width QKV projection (c_attn).  Grid: (B, S//ts).
# ---------------------------------------------------------------------------
def qkv_proj_kernel(x_ref, w_ref, b_ref, q_ref, k_ref, v_ref, *, embed):
    # x_ref: (1, ts, E)   w_ref: (E, 3E)   b_ref: (1, 3E)
    # q_ref / k_ref / v_ref: (1, ts, E)
    x = x_ref[0]
    y = jnp.dot(x, w_ref[...], preferred_element_type=jnp.float32) + b_ref[...]
    q_ref[0] = y[:, :embed].astype(q_ref.dtype)
    k_ref[0] = y[:, embed:2 * embed].astype(k_ref.dtype)
    v_ref[0] = y[:, 2 * embed:].astype(v_ref.dtype)


# ---------------------------------------------------------------------------
# Kernel 2: causal flash attention + output projection (c_proj), fused.
# Grid: (B, S//tq).  Heads and kv blocks are in-kernel loops; K/V for the
# whole sequence are resident in VMEM (constant index_map per batch).
# ---------------------------------------------------------------------------
def attn_proj_kernel(q_ref, k_ref, v_ref, wproj_ref, bproj_ref, o_ref, y_sc,
                     *, num_heads, head_dim, q_tile, kv_tile):
    qi = pl.program_id(1)
    q_start = qi * q_tile
    neg = float(jnp.finfo(jnp.float32).min)

    # kv blocks strictly below the causal diagonal for this q tile (dynamic),
    # and diagonal-straddling blocks (static count, the only ones needing mask).
    n_unmasked = q_start // kv_tile
    n_diag = q_tile // kv_tile

    for h in range(num_heads):
        lo, hi = h * head_dim, (h + 1) * head_dim
        q = q_ref[0, :, lo:hi]                       # (tq, D); 1/sqrt(D) in Wq/bq

        def block_update(k_start, carry, masked):
            m_prev, l_prev, acc_prev = carry
            k = k_ref[0, pl.ds(k_start, kv_tile), lo:hi]     # (tkv, D)
            v = v_ref[0, pl.ds(k_start, kv_tile), lo:hi]     # (tkv, D)
            # QK^T: contract D on both operands -> no materialized transpose.
            s = lax.dot_general(q, k, (((1,), (1,)), ((), ())),
                                preferred_element_type=jnp.float32)  # (tq, tkv)
            if masked:   # only diagonal-straddling blocks pay the mask VALU cost
                row = q_start + lax.broadcasted_iota(jnp.int32, s.shape, 0)
                col = k_start + lax.broadcasted_iota(jnp.int32, s.shape, 1)
                s = jnp.where(row >= col, s, neg)
            m_new = jnp.maximum(m_prev, s.max(axis=-1, keepdims=True))
            alpha = jnp.exp(m_prev - m_new)
            p = jnp.exp(s - m_new)
            l_new = alpha * l_prev + p.sum(axis=-1, keepdims=True)
            acc_new = alpha * acc_prev + jnp.dot(
                p.astype(v.dtype), v, preferred_element_type=jnp.float32)
            return m_new, l_new, acc_new

        carry = (jnp.full((q_tile, 1), -jnp.inf, jnp.float32),
                 jnp.zeros((q_tile, 1), jnp.float32),
                 jnp.zeros((q_tile, head_dim), jnp.float32))

        # Below-diagonal kv blocks: causally trimmed dynamic trip count, no mask.
        carry = lax.fori_loop(
            0, n_unmasked,
            lambda i, c: block_update(pl.multiple_of(i * kv_tile, kv_tile),
                                      c, False),
            carry)

        # Diagonal-straddling kv blocks: static count, masked.
        for j in range(n_diag):
            carry = block_update(q_start + j * kv_tile, carry, True)

        _, l_fin, acc_fin = carry
        # Exact normalization (once per head per q tile) -> head-concat scratch.
        y_sc[:, lo:hi] = acc_fin / l_fin

    # Output projection: single full-width (tq, E) @ (E, E) matmul per q tile.
    y = y_sc[...].astype(wproj_ref.dtype)
    out = jnp.dot(y, wproj_ref[...], preferred_element_type=jnp.float32)
    o_ref[0] = (out + bproj_ref[...]).astype(o_ref.dtype)


# ---------------------------------------------------------------------------
# Wrapper
# ---------------------------------------------------------------------------
def gpt2_attention_mixer(x, wqkv, bqkv, wproj, bproj, *, num_heads,
                         seq_tile=256, q_tile=256, kv_tile=256):
    """GPT2AttentionMixer forward (attn_pdrop = resid_pdrop = 0.0)."""
    B, S, E = x.shape
    H = num_heads
    assert E % H == 0
    D = E // H
    assert S % 8 == 0

    ts = _largest_divisor_tile(S, seq_tile)     # sequence tile for c_attn
    tq = _largest_divisor_tile(S, q_tile)       # q tile (divides S)
    tkv = _largest_divisor_tile(tq, kv_tile)    # kv tile (divides tq)
    dtype = x.dtype
    itemsize = jnp.dtype(dtype).itemsize

    # Fold the 1/sqrt(D) attention scale into the Q columns of Wqkv / bqkv.
    scale = jnp.concatenate([jnp.full((E,), 1.0 / math.sqrt(D), jnp.float32),
                             jnp.ones((2 * E,), jnp.float32)])
    wqkv_s = (wqkv.astype(jnp.float32) * scale[None, :]).astype(wqkv.dtype)
    bqkv_s = (bqkv.astype(jnp.float32) * scale[None, :]).astype(bqkv.dtype)

    # ---- Kernel 1: c_attn -> Q, K, V each (B, S, E), lane-dense ----
    qkv_cost = pl.CostEstimate(
        flops=2 * B * S * E * 3 * E,
        transcendentals=0,
        bytes_accessed=itemsize * (4 * B * S * E + 3 * E * E + 3 * E))
    sds = jax.ShapeDtypeStruct((B, S, E), dtype)
    q, k, v = pl.pallas_call(
        functools.partial(qkv_proj_kernel, embed=E),
        out_shape=(sds, sds, sds),
        grid=(B, S // ts),
        in_specs=[
            pl.BlockSpec((1, ts, E), lambda b, si: (b, si, 0)),
            pl.BlockSpec((E, 3 * E), lambda b, si: (0, 0)),   # Wqkv resident
            pl.BlockSpec((1, 3 * E), lambda b, si: (0, 0)),   # bqkv resident
        ],
        out_specs=[
            pl.BlockSpec((1, ts, E), lambda b, si: (b, si, 0)),
            pl.BlockSpec((1, ts, E), lambda b, si: (b, si, 0)),
            pl.BlockSpec((1, ts, E), lambda b, si: (b, si, 0)),
        ],
        compiler_params=pltpu.CompilerParams(
            dimension_semantics=("parallel", "parallel"),
            vmem_limit_bytes=48 * 1024 * 1024),
        cost_estimate=qkv_cost,
    )(x, wqkv_s, bqkv_s)

    # ---- Kernel 2: causal flash attention + c_proj ----
    attn_cost = pl.CostEstimate(
        flops=2 * B * S * S * E + 2 * B * S * E * E,          # causal attn + proj
        transcendentals=B * H * S * S // 2,
        bytes_accessed=itemsize * (4 * B * S * E + E * E + E))
    out = pl.pallas_call(
        functools.partial(attn_proj_kernel, num_heads=H, head_dim=D,
                          q_tile=tq, kv_tile=tkv),
        out_shape=jax.ShapeDtypeStruct((B, S, E), dtype),
        grid=(B, S // tq),
        in_specs=[
            pl.BlockSpec((1, tq, E), lambda b, qi: (b, qi, 0)),
            pl.BlockSpec((1, S, E), lambda b, qi: (b, 0, 0)),  # whole-seq K resident
            pl.BlockSpec((1, S, E), lambda b, qi: (b, 0, 0)),  # whole-seq V resident
            pl.BlockSpec((E, E), lambda b, qi: (0, 0)),        # Wproj resident
            pl.BlockSpec((1, E), lambda b, qi: (0, 0)),        # bproj resident
        ],
        out_specs=pl.BlockSpec((1, tq, E), lambda b, qi: (b, qi, 0)),
        scratch_shapes=[pltpu.VMEM((tq, E), jnp.float32)],     # head-concat scratch
        compiler_params=pltpu.CompilerParams(
            dimension_semantics=("parallel", "parallel"),
            vmem_limit_bytes=48 * 1024 * 1024),
        cost_estimate=attn_cost,
    )(q, k, v, wproj, bproj)
    return out


# ---------------------------------------------------------------------------
# Pure-JAX reference (always f32) for verification.
# ---------------------------------------------------------------------------
def reference(x, wqkv, bqkv, wproj, bproj, num_heads):
    B, S, E = x.shape
    D = E // num_heads
    xf = x.astype(jnp.float32)
    qkv = xf @ wqkv.astype(jnp.float32) + bqkv[0].astype(jnp.float32)
    q, k, v = jnp.split(qkv, 3, axis=-1)

    def split_heads(t):
        return t.reshape(B, S, num_heads, D).transpose(0, 2, 1, 3)

    q, k, v = split_heads(q), split_heads(k), split_heads(v)
    scores = jnp.einsum('bhqd,bhkd->bhqk', q, k) / math.sqrt(D)
    causal = jnp.tril(jnp.ones((S, S), bool))
    scores = jnp.where(causal[None, None], scores, jnp.finfo(jnp.float32).min)
    w = jax.nn.softmax(scores, axis=-1)
    out = jnp.einsum('bhqk,bhkd->bhqd', w, v).transpose(0, 2, 1, 3).reshape(B, S, E)
    return out @ wproj.astype(jnp.float32) + bproj[0].astype(jnp.float32)


if __name__ == "__main__":
    E, H = 32, 2                       # model_size=32, num_heads=2, dropout=0.0

    key = jax.random.PRNGKey(0)
    kx1, kx2, kqkv, kbq, kproj, kbp = jax.random.split(key, 6)

    wqkv = 0.02 * jax.random.normal(kqkv, (E, 3 * E), dtype=jnp.float32)
    bqkv = 0.02 * jax.random.normal(kbq, (1, 3 * E), dtype=jnp.float32)
    wproj = 0.02 * jax.random.normal(kproj, (E, E), dtype=jnp.float32)
    bproj = 0.02 * jax.random.normal(kbp, (1, E), dtype=jnp.float32)

    # --- config 1: B=2, S=8 (single q tile, diagonal-only kv blocks), f32 ---
    B1, S1 = 2, 8
    x1 = jax.random.normal(kx1, (B1, S1, E), dtype=jnp.float32)
    out1 = jax.block_until_ready(
        gpt2_attention_mixer(x1, wqkv, bqkv, wproj, bproj, num_heads=H))
    ref1 = reference(x1, wqkv, bqkv, wproj, bproj, H)
    assert out1.shape == (B1, S1, E)
    assert jnp.allclose(out1, ref1, rtol=1e-2, atol=1e-3), "f32 mismatch (config 1)"

    # --- config 2: B=1, S=32, tq=tkv=8: exercises the causally trimmed
    #     unmasked fori_loop plus one masked diagonal block per q tile ---
    B2, S2 = 1, 32
    x2 = jax.random.normal(kx2, (B2, S2, E), dtype=jnp.float32)
    out2 = jax.block_until_ready(
        gpt2_attention_mixer(x2, wqkv, bqkv, wproj, bproj, num_heads=H,
                             q_tile=8, kv_tile=8))
    ref2 = reference(x2, wqkv, bqkv, wproj, bproj, H)
    assert out2.shape == (B2, S2, E)
    assert jnp.allclose(out2, ref2, rtol=1e-2, atol=1e-3), "f32 mismatch (config 2)"

    # --- config 3: tq=16, tkv=8: multiple masked diagonal blocks per q tile ---
    out3 = jax.block_until_ready(
        gpt2_attention_mixer(x2, wqkv, bqkv, wproj, bproj, num_heads=H,
                             q_tile=16, kv_tile=8))
    assert jnp.allclose(out3, ref2, rtol=1e-2, atol=1e-3), "f32 mismatch (config 3)"

    # --- config 4: bf16 operands (MXU bf16 path), f32 accumulation inside ---
    out4 = jax.block_until_ready(
        gpt2_attention_mixer(x1.astype(jnp.bfloat16), wqkv.astype(jnp.bfloat16),
                             bqkv.astype(jnp.bfloat16), wproj.astype(jnp.bfloat16),
                             bproj.astype(jnp.bfloat16), num_heads=H))
    assert jnp.allclose(out4.astype(jnp.float32), ref1, rtol=1e-1, atol=5e-3), \
        "bf16 mismatch (config 4)"

    print("KERNEL_OK")
</pallas_src>

<mosaic_0001>
module attributes {stable_mosaic.version = 11 : i64} {
  func.func @qkv_proj_kernel(%arg0: i32, %arg1: i32, %arg2: memref<1x8x32xf32, #tpu.memory_space<vmem>>, %arg3: memref<32x96xf32, #tpu.memory_space<vmem>>, %arg4: memref<1x96xf32, #tpu.memory_space<vmem>>, %arg5: memref<1x8x32xf32, #tpu.memory_space<vmem>>, %arg6: memref<1x8x32xf32, #tpu.memory_space<vmem>>, %arg7: memref<1x8x32xf32, #tpu.memory_space<vmem>>) attributes {dimension_semantics = [#tpu.dimension_semantics<parallel>, #tpu.dimension_semantics<parallel>], iteration_bounds = array<i64: 2, 1>, scalar_prefetch = 0 : i64, scratch_operands = 0 : i64, tpu.core_type = #tpu.core_type<tc>, window_params = [{transform_indices = @transform_0, window_bounds = array<i64: 1, 8, 32>}, {pipeline_mode = #tpu.pipeline_mode<synchronous>, transform_indices = @transform_1, window_bounds = array<i64: 32, 96>}, {pipeline_mode = #tpu.pipeline_mode<synchronous>, transform_indices = @transform_2, window_bounds = array<i64: 1, 96>}, {transform_indices = @transform_3, window_bounds = array<i64: 1, 8, 32>}, {transform_indices = @transform_4, window_bounds = array<i64: 1, 8, 32>}, {transform_indices = @transform_5, window_bounds = array<i64: 1, 8, 32>}]} {
    %c0 = arith.constant 0 : index
    %c0_0 = arith.constant 0 : index
    %c0_1 = arith.constant 0 : index
    %0 = vector.load %arg2[%c0, %c0_0, %c0_1] : memref<1x8x32xf32, #tpu.memory_space<vmem>>, vector<1x8x32xf32>
    %1 = vector.shape_cast %0 : vector<1x8x32xf32> to vector<8x32xf32>
    %c0_2 = arith.constant 0 : index
    %c0_3 = arith.constant 0 : index
    %2 = vector.load %arg3[%c0_2, %c0_3] : memref<32x96xf32, #tpu.memory_space<vmem>>, vector<32x96xf32>
    %cst = arith.constant dense<0.000000e+00> : vector<8x96xf32>
    %3 = tpu.matmul %1, %2, %cst {dimension_numbers = #tpu.dot_dimension_numbers<[1], [0], [0], [1], [0, 0, 1, 1], [], []>} : vector<8x32xf32>, vector<32x96xf32>, vector<8x96xf32> -> vector<8x96xf32>
    %c0_4 = arith.constant 0 : index
    %c0_5 = arith.constant 0 : index
    %4 = vector.load %arg4[%c0_4, %c0_5] : memref<1x96xf32, #tpu.memory_space<vmem>>, vector<1x96xf32>
    %5 = vector.broadcast %4 : vector<1x96xf32> to vector<8x96xf32>
    %6 = arith.addf %3, %5 : vector<8x96xf32>
    %7 = vector.extract_strided_slice %6 {offsets = [0, 0], sizes = [8, 32], strides = [1, 1]} : vector<8x96xf32> to vector<8x32xf32>
    %c0_6 = arith.constant 0 : index
    %c0_7 = arith.constant 0 : index
    %c0_8 = arith.constant 0 : index
    %8 = vector.load %arg5[%c0_6, %c0_7, %c0_8] : memref<1x8x32xf32, #tpu.memory_space<vmem>>, vector<1x8x32xf32>
    %9 = vector.shape_cast %8 : vector<1x8x32xf32> to vector<8x32xf32>
    %10 = vector.shape_cast %7 : vector<8x32xf32> to vector<1x8x32xf32>
    tpu.vector_store %arg5[%c0_6, %c0_7, %c0_8], %10 {strides = array<i32>} : memref<1x8x32xf32, #tpu.memory_space<vmem>>, vector<1x8x32xf32>,
    %11 = vector.extract_strided_slice %6 {offsets = [0, 32], sizes = [8, 32], strides = [1, 1]} : vector<8x96xf32> to vector<8x32xf32>
    %c0_9 = arith.constant 0 : index
    %c0_10 = arith.constant 0 : index
    %c0_11 = arith.constant 0 : index
    %12 = vector.load %arg6[%c0_9, %c0_10, %c0_11] : memref<1x8x32xf32, #tpu.memory_space<vmem>>, vector<1x8x32xf32>
    %13 = vector.shape_cast %12 : vector<1x8x32xf32> to vector<8x32xf32>
    %14 = vector.shape_cast %11 : vector<8x32xf32> to vector<1x8x32xf32>
    tpu.vector_store %arg6[%c0_9, %c0_10, %c0_11], %14 {strides = array<i32>} : memref<1x8x32xf32, #tpu.memory_space<vmem>>, vector<1x8x32xf32>,
    %15 = vector.extract_strided_slice %6 {offsets = [0, 64], sizes = [8, 32], strides = [1, 1]} : vector<8x96xf32> to vector<8x32xf32>
    %c0_12 = arith.constant 0 : index
    %c0_13 = arith.constant 0 : index
    %c0_14 = arith.constant 0 : index
    %16 = vector.load %arg7[%c0_12, %c0_13, %c0_14] : memref<1x8x32xf32, #tpu.memory_space<vmem>>, vector<1x8x32xf32>
    %17 = vector.shape_cast %16 : vector<1x8x32xf32> to vector<8x32xf32>
    %18 = vector.shape_cast %15 : vector<8x32xf32> to vector<1x8x32xf32>
    tpu.vector_store %arg7[%c0_12, %c0_13, %c0_14], %18 {strides = array<i32>} : memref<1x8x32xf32, #tpu.memory_space<vmem>>, vector<1x8x32xf32>,
    return
  }
  func.func @transform_0(%arg0: i32, %arg1: i32) -> (i32, i32, i32) {
    %c0_i32 = arith.constant 0 : i32
    %c0_i32_0 = arith.constant 0 : i32
    return %arg0, %arg1, %c0_i32 : i32, i32, i32
  }
  func.func @transform_1(%arg0: i32, %arg1: i32) -> (i32, i32) {
    %c0_i32 = arith.constant 0 : i32
    %c0_i32_0 = arith.constant 0 : i32
    %c0_i32_1 = arith.constant 0 : i32
    return %c0_i32, %c0_i32_0 : i32, i32
  }
  func.func @transform_2(%arg0: i32, %arg1: i32) -> (i32, i32) {
    %c0_i32 = arith.constant 0 : i32
    %c0_i32_0 = arith.constant 0 : i32
    %c0_i32_1 = arith.constant 0 : i32
    return %c0_i32, %c0_i32_0 : i32, i32
  }
  func.func @transform_3(%arg0: i32, %arg1: i32) -> (i32, i32, i32) {
    %c0_i32 = arith.constant 0 : i32
    %c0_i32_0 = arith.constant 0 : i32
    return %arg0, %arg1, %c0_i32 : i32, i32, i32
  }
  func.func @transform_4(%arg0: i32, %arg1: i32) -> (i32, i32, i32) {
    %c0_i32 = arith.constant 0 : i32
    %c0_i32_0 = arith.constant 0 : i32
    return %arg0, %arg1, %c0_i32 : i32, i32, i32
  }
  func.func @transform_5(%arg0: i32, %arg1: i32) -> (i32, i32, i32) {
    %c0_i32 = arith.constant 0 : i32
    %c0_i32_0 = arith.constant 0 : i32
    return %arg0, %arg1, %c0_i32 : i32, i32, i32
  }
}

</mosaic_0001>

<llo_original>
// kernel: tpu_custom_call.1
$region0: #{tpu_custom_call.1}
  #allocation0 [shape = 'u32[]', space=smem, size = 0x4, offset = 0x4, fixed_abs, tag = 'smem constant byte address 0x4 - core index']
  #allocation1 [shape = 'u32[144,128]{1,0:T(1,128)}', space=vmem, size = 0x12000, scoped, tag = 'internal scratch']
  %s0 = inlined_call_operand.hbm [shape: f32[2,8,32], index: 0, kind: input, shape index: {}]
  %s1 = inlined_call_operand.hbm [shape: f32[32,96], index: 1, kind: input, shape index: {}]
  %s2 = inlined_call_operand.vmem [shape: f32[1,96], index: 2, kind: input, shape index: {}]
  %s3 = inlined_call_operand.hbm [shape: f32[2,8,32], index: 3, kind: output, shape index: {0}]
  %s4 = inlined_call_operand.hbm [shape: f32[2,8,32], index: 4, kind: output, shape index: {1}]
  %s5 = inlined_call_operand.hbm [shape: f32[2,8,32], index: 5, kind: output, shape index: {2}]
  %6 = xla_tuple %s3, %s4, %s5
  %s7 = sld [smem:[#allocation0]]
  $region69: #{tpu_custom_call.1} parent=0
    _
  %s9 = ssub.s32 1, %s7
  %s10 = scalar_select 0, %s9, %s7
  $region1: #{tpu_custom_call.1} parent=0
    #allocation2 [shape = 'u8[8192]{0}', space=vmem, size = 0x2000, scoped, tag = 'input window, operand 0']
    #allocation3 [shape = 's32[2]{0}', space=sflag, size = 0x8, scoped, tag = 'scoped memory for tpu_custom_call.1']
    #allocation4 [shape = 's32[2]{0}', space=sflag, size = 0x8, scoped, tag = 'scoped memory for tpu_custom_call.1']
    #allocation5 [shape = 'u8[16384]{0}', space=vmem, size = 0x4000, scoped, tag = 'input window, operand 1, single buffered']
    #allocation6 [shape = 's32[1]{0}', space=sflag, size = 0x4, scoped, tag = 'scoped memory for tpu_custom_call.1']
    #allocation7 [shape = 'u8[8192]{0}', space=vmem, size = 0x2000, scoped, tag = 'output window, operand 0']
    #allocation8 [shape = 'u8[8192]{0}', space=vmem, size = 0x2000, scoped, tag = 'output window, operand 1']
    #allocation9 [shape = 's32[2]{0}', space=sflag, size = 0x8, scoped, tag = 'scoped memory for tpu_custom_call.1']
    #allocation10 [shape = 'u8[8192]{0}', space=vmem, size = 0x2000, scoped, tag = 'output window, operand 2']
    %11 = vsyncpa [#allocation3], 0
    %s12 = scalar_lea.sflag [#allocation3], 1
    %13 = vsyncpa %s12, 0
    %14 = vsyncpa [#allocation6], 0
    %15 = vsyncpa [#allocation4], 0
    %s16 = scalar_lea.sflag [#allocation4], 1
    %17 = vsyncpa %s16, 0
    %18 = vsyncpa [#allocation9], 0
    %s19 = scalar_lea.sflag [#allocation9], 1
    %20 = vsyncpa %s19, 0
    loop: start=0, step=1, limit=4
    $region2: #{tpu_custom_call.1} parent=1 // loop_pre_header
      _
    $region3: #{tpu_custom_call.1} parent=1 // loop_header
      %s22 = sphi 0, %s26
      %p23 = scmp.ge.s32.totalorder %s22, 4
      %s29 = sphi 0, %s41
      %s30 = sphi 0, %s37
      %s31 = sphi 0, %s29
      %s32 = sphi 0, %s30
      %s33 = sphi 0, %s31
      %s34 = sphi 0, %s32
      %s46 = sphi 0, %s48
      %s49 = sphi 0, %s46
      %s50 = sphi 0, %s49
      %s66 = sphi 0, %s50
      %s70 = sphi 0, %s70
      %s72 = sphi 0, %s70
      %s73 = sphi 0, %s72
      %s87 = sphi 0, %s73
      %s91 = sphi 0, %s91
      %s93 = sphi 0, %s91
      %s94 = sphi 0, %s93
      %s108 = sphi 0, %s94
      %s116 = sphi 0, %s118
      %s119 = sphi 0, %s116
      %s120 = sphi 0, %s119
      %s136 = sphi 0, %s120
      %s144 = sphi 0, %s146
      %s147 = sphi 0, %s144
      %s148 = sphi 0, %s147
      %s164 = sphi 0, %s148
      %s172 = sphi 0, %s174
      %s175 = sphi 0, %s172
      %s176 = sphi 0, %s175
      %s192 = sphi 0, %s176
    $region4: #{tpu_custom_call.1} parent=1 // loop_header_branch
      %25 = sbr.rel (%p23) target = $region8
    $region5: #{tpu_custom_call.1} parent=1 // loop_body
      %s27 = ssub.s32 %s22, 1
      %s28 = ssub.s32 %s22, 2
      %s35 = sadd.s32 1, %s30
      %p36 = scmp.ge.s32.totalorder %s35, 1
      %s37 = scalar_select %p36, 0, %s35
      %s38 = sadd.s32 1, %s29
      %s39 = scalar_select %p36, %s38, %s29
      %p40 = scmp.ge.s32.totalorder %s39, 2
      %s41 = scalar_select %p40, 0, %s39
      %s42 = ssub.s32 %s29, %s41
      %s43 = ssub.s32 %s30, %s37
      %s44 = sor.u32 %s42, %s43
      %p45 = scmp.eq.s32.totalorder %s44, 0
      %s47 = sadd.s32 %s46, 1
      %s48 = scalar_select %p45, %s46, %s47
      %p51 = pneg %p45
      %p52 = scmp.eq.s32.totalorder %s22, 1
      %p53 = por %p51, %p52
      %p54 = scmp.ne.s32.totalorder %s46, %s49
      %p55 = scmp.eq.s32.totalorder %s22, 0
      %p56 = por %p54, %p55
      %p57 = scmp.ne.s32.totalorder %s46, %s49
      %p58 = scmp.eq.s32.totalorder %s27, 1
      %p59 = por %p57, %p58
      %p60 = scmp.ne.s32.totalorder %s49, %s50
      %p61 = scmp.eq.s32.totalorder %s27, 0
      %p62 = por %p60, %p61
      %p63 = scmp.ne.s32.totalorder %s49, %s50
      %p64 = scmp.eq.s32.totalorder %s28, 1
      %p65 = por %p63, %p64
      %p67 = scmp.ne.s32.totalorder %s50, %s66
      %p68 = scmp.eq.s32.totalorder %s28, 0
      %p69 = por %p67, %p68
      %s71 = sadd.s32 %s70, 1
      %p74 = scmp.eq.s32.totalorder %s22, 1
      %p75 = scmp.ne.s32.totalorder %s70, %s72
      %p76 = scmp.eq.s32.totalorder %s22, 0
      %p77 = por %p75, %p76
      %p78 = scmp.ne.s32.totalorder %s70, %s72
      %p79 = scmp.eq.s32.totalorder %s27, 1
      %p80 = por %p78, %p79
      %p81 = scmp.ne.s32.totalorder %s72, %s73
      %p82 = scmp.eq.s32.totalorder %s27, 0
      %p83 = por %p81, %p82
      %p84 = scmp.ne.s32.totalorder %s72, %s73
      %p85 = scmp.eq.s32.totalorder %s28, 1
      %p86 = por %p84, %p85
      %p88 = scmp.ne.s32.totalorder %s73, %s87
      %p89 = scmp.eq.s32.totalorder %s28, 0
      %p90 = por %p88, %p89
      %s92 = sadd.s32 %s91, 1
      %p95 = scmp.eq.s32.totalorder %s22, 1
      %p96 = scmp.ne.s32.totalorder %s91, %s93
      %p97 = scmp.eq.s32.totalorder %s22, 0
      %p98 = por %p96, %p97
      %p99 = scmp.ne.s32.totalorder %s91, %s93
      %p100 = scmp.eq.s32.totalorder %s27, 1
      %p101 = por %p99, %p100
      %p102 = scmp.ne.s32.totalorder %s93, %s94
      %p103 = scmp.eq.s32.totalorder %s27, 0
      %p104 = por %p102, %p103
      %p105 = scmp.ne.s32.totalorder %s93, %s94
      %p106 = scmp.eq.s32.totalorder %s28, 1
      %p107 = por %p105, %p106
      %p109 = scmp.ne.s32.totalorder %s94, %s108
      %p110 = scmp.eq.s32.totalorder %s28, 0
      %p111 = por %p109, %p110
      %s112 = ssub.s32 %s29, %s41
      %s113 = ssub.s32 %s30, %s37
      %s114 = sor.u32 %s112, %s113
      %p115 = scmp.eq.s32.totalorder %s114, 0
      %s117 = sadd.s32 %s116, 1
      %s118 = scalar_select %p115, %s116, %s117
      %p121 = pneg %p115
      %p122 = scmp.eq.s32.totalorder %s22, 1
      %p123 = por %p121, %p122
      %p124 = scmp.ne.s32.totalorder %s116, %s119
      %p125 = scmp.eq.s32.totalorder %s22, 0
      %p126 = por %p124, %p125
      %p127 = scmp.ne.s32.totalorder %s116, %s119
      %p128 = scmp.eq.s32.totalorder %s27, 1
      %p129 = por %p127, %p128
      %p130 = scmp.ne.s32.totalorder %s119, %s120
      %p131 = scmp.eq.s32.totalorder %s27, 0
      %p132 = por %p130, %p131
      %p133 = scmp.ne.s32.totalorder %s119, %s120
      %p134 = scmp.eq.s32.totalorder %s28, 1
      %p135 = por %p133, %p134
      %p137 = scmp.ne.s32.totalorder %s120, %s136
      %p138 = scmp.eq.s32.totalorder %s28, 0
      %p139 = por %p137, %p138
      %s140 = ssub.s32 %s29, %s41
      %s141 = ssub.s32 %s30, %s37
      %s142 = sor.u32 %s140, %s141
      %p143 = scmp.eq.s32.totalorder %s142, 0
      %s145 = sadd.s32 %s144, 1
      %s146 = scalar_select %p143, %s144, %s145
      %p149 = pneg %p143
      %p150 = scmp.eq.s32.totalorder %s22, 1
      %p151 = por %p149, %p150
      %p152 = scmp.ne.s32.totalorder %s144, %s147
      %p153 = scmp.eq.s32.totalorder %s22, 0
      %p154 = por %p152, %p153
      %p155 = scmp.ne.s32.totalorder %s144, %s147
      %p156 = scmp.eq.s32.totalorder %s27, 1
      %p157 = por %p155, %p156
      %p158 = scmp.ne.s32.totalorder %s147, %s148
      %p159 = scmp.eq.s32.totalorder %s27, 0
      %p160 = por %p158, %p159
      %p161 = scmp.ne.s32.totalorder %s147, %s148
      %p162 = scmp.eq.s32.totalorder %s28, 1
      %p163 = por %p161, %p162
      %p165 = scmp.ne.s32.totalorder %s148, %s164
      %p166 = scmp.eq.s32.totalorder %s28, 0
      %p167 = por %p165, %p166
      %s168 = ssub.s32 %s29, %s41
      %s169 = ssub.s32 %s30, %s37
      %s170 = sor.u32 %s168, %s169
      %p171 = scmp.eq.s32.totalorder %s170, 0
      %s173 = sadd.s32 %s172, 1
      %s174 = scalar_select %p171, %s172, %s173
      %p177 = pneg %p171
      %p178 = scmp.eq.s32.totalorder %s22, 1
      %p179 = por %p177, %p178
      %p180 = scmp.ne.s32.totalorder %s172, %s175
      %p181 = scmp.eq.s32.totalorder %s22, 0
      %p182 = por %p180, %p181
      %p183 = scmp.ne.s32.totalorder %s172, %s175
      %p184 = scmp.eq.s32.totalorder %s27, 1
      %p185 = por %p183, %p184
      %p186 = scmp.ne.s32.totalorder %s175, %s176
      %p187 = scmp.eq.s32.totalorder %s27, 0
      %p188 = por %p186, %p187
      %p189 = scmp.ne.s32.totalorder %s175, %s176
      %p190 = scmp.eq.s32.totalorder %s28, 1
      %p191 = por %p189, %p190
      %p193 = scmp.ne.s32.totalorder %s176, %s192
      %p194 = scmp.eq.s32.totalorder %s28, 0
      %p195 = por %p193, %p194
      %p196 = scmp.le.s32.totalorder 1, %s22
      %p197 = scmp.lt.s32.totalorder %s22, 3
      %p198 = pnand %p196, %p197
      %p199 = pneg %p198
      // Predicated region
      $region9: #{tpu_custom_call.1} parent=5 // pred_check
        _
      $region10: #{tpu_custom_call.1} parent=5 // pred_check_branch
        %201 = sbr.rel (%p198) target = $region12
      $region11: #{tpu_custom_call.1} parent=5 // pred_region
        %s202 = ssub.s32 %s22, 1
        // Predicated region
        $region13: #{tpu_custom_call.1} parent=11 // pred_check
          %p203 = pneg %p83
        $region14: #{tpu_custom_call.1} parent=11 // pred_check_branch
          %205 = sbr.rel (%p203) target = $region16
        $region15: #{tpu_custom_call.1} parent=11 // pred_region
          %s207 = ssub.s32 512, 512
          %208 = vsyncadd [#allocation6], %s207
          %s209 = sshll.u32 [#allocation5], 4
          %s210 = int_to_ptr.vmem [resolvable:$true] %s209
          %215 = dma.hbm_to_vmem [thread:$0]  %s1, 512, %s210, [#allocation6], 128, 128, 8
        $region16: #{tpu_custom_call.1} parent=11 // pred_fallthru
          _
        // Predicated region
        $region17: #{tpu_custom_call.1} parent=11 // pred_check
          %p216 = pneg %p104
        $region18: #{tpu_custom_call.1} parent=11 // pred_check_branch
          %218 = sbr.rel (%p216) target = $region20
        $region19: #{tpu_custom_call.1} parent=11 // pred_region
          _
        $region20: #{tpu_custom_call.1} parent=11 // pred_fallthru
          _
      $region12: #{tpu_custom_call.1} parent=5 // pred_fallthru
        _
      %p219 = scmp.lt.s32.totalorder %s22, 2
      // Predicated region
      $region21: #{tpu_custom_call.1} parent=5 // pred_check
        %p220 = pneg %p219
      $region22: #{tpu_custom_call.1} parent=5 // pred_check_branch
        %222 = sbr.rel (%p220) target = $region24
      $region23: #{tpu_custom_call.1} parent=5 // pred_region
        // Predicated region
        $region25: #{tpu_custom_call.1} parent=23 // pred_check
          %p223 = pneg %p56
        $region26: #{tpu_custom_call.1} parent=23 // pred_check_branch
          %225 = sbr.rel (%p223) target = $region28
        $region27: #{tpu_custom_call.1} parent=23 // pred_region
          %s226 = sand.u32 %s46, 1
          %s227 = scalar_lea.sflag [#allocation3], %s226
          %s228 = sand.u32 %s46, 1
          %s229 = smul.addr %s228, 8
          %s230 = scalar_lea.vmem [#allocation2], %s229
          %s232 = ssub.s32 128, 128
          %233 = vsyncadd %s227, %s232
          %s234 = sadd.s32 %s30, %s29
          %s235 = smul.addr %s234, 128
          %s236 = scalar_lea.hbm %s0, %s235
          %s238 = sshll.u32 %s230, 4
          %s239 = int_to_ptr.vmem [resolvable:$true] %s238
          %241 = dma.hbm_to_vmem [thread:$0]  %s236, 128, %s239, %s227
        $region28: #{tpu_custom_call.1} parent=23 // pred_fallthru
          _
      $region24: #{tpu_custom_call.1} parent=5 // pred_fallthru
        _
      %p242 = scmp.le.s32.totalorder 1, %s22
      %p243 = scmp.lt.s32.totalorder %s22, 3
      %p244 = pnand %p242, %p243
      %p245 = pneg %p244
      // Predicated region
      $region29: #{tpu_custom_call.1} parent=5 // pred_check
        _
      $region30: #{tpu_custom_call.1} parent=5 // pred_check_branch
        %247 = sbr.rel (%p244) target = $region32
      $region31: #{tpu_custom_call.1} parent=5 // pred_region
        %s248 = ssub.s32 %s22, 1
        %s249 = sand.u32 %s49, 1
        %s250 = scalar_lea.sflag [#allocation3], %s249
        %s251 = sand.u32 %s49, 1
        %s252 = smul.addr %s251, 8
        %s253 = scalar_lea.vmem [#allocation2], %s252
        // Predicated region
        $region33: #{tpu_custom_call.1} parent=31 // pred_check
          %p254 = pneg %p62
        $region34: #{tpu_custom_call.1} parent=31 // pred_check_branch
          %256 = sbr.rel (%p254) target = $region36
        $region35: #{tpu_custom_call.1} parent=31 // pred_region
          %257 = dma.done %s250, 128
        $region36: #{tpu_custom_call.1} parent=31 // pred_fallthru
          _
        // Predicated region
        $region37: #{tpu_custom_call.1} parent=31 // pred_check
          %p258 = pneg %p83
        $region38: #{tpu_custom_call.1} parent=31 // pred_check_branch
          %260 = sbr.rel (%p258) target = $region40
        $region39: #{tpu_custom_call.1} parent=31 // pred_region
          %261 = dma.done [#allocation6], 512
        $region40: #{tpu_custom_call.1} parent=31 // pred_fallthru
          _
        %s262 = sand.u32 %s49, 1
        %s263 = scalar_lea.sflag [#allocation3], %s262
        %s264 = sand.u32 %s49, 1
        %s265 = smul.addr %s264, 8
        %s266 = scalar_lea.vmem [#allocation2], %s265
        %p267 = pneg %p62
        %p268 = pneg %p59
        %p269 = pneg %p83
        %p270 = pneg %p80
        %p271 = pneg %p104
        %p272 = pneg %p101
        %p273 = pneg %p132
        %p274 = pneg %p129
        %s275 = sand.u32 %s119, 1
        %s276 = scalar_lea.sflag [#allocation4], %s275
        %s277 = sand.u32 %s119, 1
        %s278 = smul.addr %s277, 8
        %s279 = scalar_lea.vmem [#allocation7], %s278
        %p280 = pneg %p160
        %p281 = pneg %p157
        %s282 = sand.u32 %s27, 1
        %s283 = scalar_lea.sflag [#allocation9], %s282
        %s284 = sand.u32 %s147, 1
        %s285 = smul.addr %s284, 8
        %s286 = scalar_lea.vmem [#allocation8], %s285
        %p287 = pneg %p188
        %p288 = pneg %p185
        %s289 = sand.u32 %s27, 1
        %s290 = scalar_lea.sflag [#allocation9], %s289
        %s291 = sand.u32 %s175, 1
        %s292 = smul.addr %s291, 8
        %s293 = scalar_lea.vmem [#allocation10], %s292
        %v294 = vld [vmem:[%s253] sm:$0xff]
        %v295 = vld [vmem:[#allocation5] sm:$0xff]
        %v296 = vld [vmem:[#allocation5 + $0x8] sm:$0xff]
        %v297 = vld [vmem:[#allocation5 + $0x10] sm:$0xff]
        %v298 = vld [vmem:[#allocation5 + $0x18] sm:$0xff]
        %v299 = vld [vmem:[%s2] sm:$0x1]
        %v301 = vlaneseq
        %v302 = vshrl.u32 %v301, 7
        %v303 = vsub.s32 0, %v302
        %v304 = vrot.slane %v299, %v303
        %vm306 = vcmask 261120
        %v308 = vsel %vm306, %v294, 0
        %310 = vmatprep.subr.mxu0 0.0
        %311 = vmatpush1.msra.mxu0 0.0
        %312 = vmatprep.subr.mxu0 0.0
        %313 = vmatpush1.msra.mxu0 0.0
        %314 = vmatprep.subr.mxu0 0.0
        %315 = vmatpush1.msra.mxu0 0.0
        %316 = vmatprep.subr.mxu0 0.0
        %317 = vmatpush1.msra.mxu0 0.0
        %318 = vmatprep.subr.mxu0 0.0
        %319 = vmatpush1.msra.mxu0 0.0
        %320 = vmatprep.subr.mxu0 0.0
        %321 = vmatpush1.msra.mxu0 0.0
        %322 = vmatprep.subr.mxu0 0.0
        %323 = vmatpush1.msra.mxu0 0.0
        %324 = vmatprep.subr.mxu0 0.0
        %325 = vmatpush1.msra.mxu0 0.0
        %326 = vmatprep.subr.mxu0 0.0
        %327 = vmatpush1.msra.mxu0 0.0
        %328 = vmatprep.subr.mxu0 0.0
        %329 = vmatpush1.msra.mxu0 0.0
        %330 = vmatprep.subr.mxu0 0.0
        %331 = vmatpush1.msra.mxu0 0.0
        %332 = vmatprep.subr.mxu0 0.0
        %333 = vmatpush1.msra.mxu0 0.0
        %334 = vmatprep.subr.mxu0 0.0
        %335 = vmatpush1.msra.mxu0 %v298
        %336 = vmatprep.subr.mxu0 0.0
        %337 = vmatpush1.msra.mxu0 %v297
        %338 = vmatprep.subr.mxu0 0.0
        %339 = vmatpush1.msra.mxu0 %v296
        %340 = vmatprep.subr.mxu0 0.0
        %341 = vmatpush1.msra.mxu0 %v295
        %342 = vmatprep.subr.mxu0 0.0
        %343 = vmatpush2.msra.mxu0 0.0
        %344 = vmatprep.subr.mxu0 0.0
        %345 = vmatpush2.msra.mxu0 0.0
        %346 = vmatprep.subr.mxu0 0.0
        %347 = vmatpush2.msra.mxu0 0.0
        %348 = vmatprep.subr.mxu0 0.0
        %349 = vmatpush2.msra.mxu0 0.0
        %350 = vmatprep.subr.mxu0 0.0
        %351 = vmatpush2.msra.mxu0 0.0
        %352 = vmatprep.subr.mxu0 0.0
        %353 = vmatpush2.msra.mxu0 0.0
        %354 = vmatprep.subr.mxu0 0.0
        %355 = vmatpush2.msra.mxu0 0.0
        %356 = vmatprep.subr.mxu0 0.0
        %357 = vmatpush2.msra.mxu0 0.0
        %358 = vmatprep.subr.mxu0 0.0
        %359 = vmatpush2.msra.mxu0 0.0
        %360 = vmatprep.subr.mxu0 0.0
        %361 = vmatpush2.msra.mxu0 0.0
        %362 = vmatprep.subr.mxu0 0.0
        %363 = vmatpush2.msra.mxu0 0.0
        %364 = vmatprep.subr.mxu0 0.0
        %365 = vmatpush2.msra.mxu0 0.0
        %366 = vmatprep.subr.mxu0 0.0
        %367 = vmatpush2.msra.mxu0 0.0
        %368 = vmatprep.subr.mxu0 0.0
        %369 = vmatpush2.msra.mxu0 0.0
        %370 = vmatprep.subr.mxu0 0.0
        %371 = vmatpush2.msra.mxu0 0.0
        %372 = vmatprep.subr.mxu0 0.0
        %373 = vmatpush2.msra.mxu0 0.0
        %374 = vmatprep.mubr.f32.mxu0 0.0
        %375 = vmatmul.mubr.f32.gmra.mxu0 %v308
        %v376 = vpop.f32.mrf.mxu0
        %v377 = vadd.f32 %v304, %v376
        %v378 = vpop.f32.mrf.mxu0
        %379 = vdwg.mxu0
        %380 = vst.msk [vmem:[%s279] sm:$0xff] %vm306, %v377
        %382 = vrot.lane.b32.xlu0 %v377, 96
        %v383 = vpop.permute.xlu0 %382
        %385 = vst.msk [vmem:[%s286] sm:$0xff] %vm306, %v383
        %386 = vrot.lane.b32.xlu0 %v377, 64
        %v387 = vpop.permute.xlu0 %386
        %389 = vst.msk [vmem:[%s293] sm:$0xff] %vm306, %v387
        %s390 = sand.u32 %s119, 1
        %s391 = scalar_lea.sflag [#allocation4], %s390
        %s392 = sand.u32 %s119, 1
        %s393 = smul.addr %s392, 8
        %s394 = scalar_lea.vmem [#allocation7], %s393
        %s395 = sand.u32 %s27, 1
        %s396 = scalar_lea.sflag [#allocation9], %s395
        %s397 = sand.u32 %s147, 1
        %s398 = smul.addr %s397, 8
        %s399 = scalar_lea.vmem [#allocation8], %s398
        %s400 = sand.u32 %s27, 1
        %s401 = scalar_lea.sflag [#allocation9], %s400
        %s402 = sand.u32 %s175, 1
        %s403 = smul.addr %s402, 8
        %s404 = scalar_lea.vmem [#allocation10], %s403
        // Predicated region
        $region41: #{tpu_custom_call.1} parent=31 // pred_check
          %p405 = pneg %p129
        $region42: #{tpu_custom_call.1} parent=31 // pred_check_branch
          %407 = sbr.rel (%p405) target = $region44
        $region43: #{tpu_custom_call.1} parent=31 // pred_region
          %s409 = ssub.s32 128, 128
          %410 = vsyncadd %s391, %s409
          %s411 = sadd.s32 %s32, %s31
          %s412 = smul.addr %s411, 128
          %s413 = scalar_lea.hbm %s3, %s412
          %s415 = sshll.u32 %s394, 4
          %s416 = int_to_ptr.vmem [resolvable:$true] %s415
          %418 = dma.vmem_to_hbm [thread:$0]  %s416, 128, %s413, %s391
        $region44: #{tpu_custom_call.1} parent=31 // pred_fallthru
          _
        // Predicated region
        $region45: #{tpu_custom_call.1} parent=31 // pred_check
          %p419 = pneg %p157
        $region46: #{tpu_custom_call.1} parent=31 // pred_check_branch
          %421 = sbr.rel (%p419) target = $region48
        $region47: #{tpu_custom_call.1} parent=31 // pred_region
          %s423 = ssub.s32 128, 128
          %424 = vsyncadd %s396, %s423
          %s425 = sadd.s32 %s32, %s31
          %s426 = smul.addr %s425, 128
          %s427 = scalar_lea.hbm %s4, %s426
          %s429 = sshll.u32 %s399, 4
          %s430 = int_to_ptr.vmem [resolvable:$true] %s429
          %432 = dma.vmem_to_hbm [thread:$0]  %s430, 128, %s427, %s396
        $region48: #{tpu_custom_call.1} parent=31 // pred_fallthru
          _
        // Predicated region
        $region49: #{tpu_custom_call.1} parent=31 // pred_check
          %p433 = pneg %p185
        $region50: #{tpu_custom_call.1} parent=31 // pred_check_branch
          %435 = sbr.rel (%p433) target = $region52
        $region51: #{tpu_custom_call.1} parent=31 // pred_region
          %s437 = ssub.s32 128, 128
          %438 = vsyncadd %s401, %s437
          %s439 = sadd.s32 %s32, %s31
          %s440 = smul.addr %s439, 128
          %s441 = scalar_lea.hbm %s5, %s440
          %s443 = sshll.u32 %s404, 4
          %s444 = int_to_ptr.vmem [resolvable:$true] %s443
          %446 = dma.vmem_to_hbm [thread:$0]  %s444, 128, %s441, %s401
        $region52: #{tpu_custom_call.1} parent=31 // pred_fallthru
          _
      $region32: #{tpu_custom_call.1} parent=5 // pred_fallthru
        _
      %p447 = scmp.le.s32.totalorder 2, %s22
      // Predicated region
      $region53: #{tpu_custom_call.1} parent=5 // pred_check
        %p448 = pneg %p447
      $region54: #{tpu_custom_call.1} parent=5 // pred_check_branch
        %450 = sbr.rel (%p448) target = $region56
      $region55: #{tpu_custom_call.1} parent=5 // pred_region
        %s451 = ssub.s32 %s22, 2
        // Predicated region
        $region57: #{tpu_custom_call.1} parent=55 // pred_check
          %p452 = pneg %p135
        $region58: #{tpu_custom_call.1} parent=55 // pred_check_branch
          %454 = sbr.rel (%p452) target = $region60
        $region59: #{tpu_custom_call.1} parent=55 // pred_region
          %s455 = sand.u32 %s120, 1
          %s456 = scalar_lea.sflag [#allocation4], %s455
          %s457 = sand.u32 %s120, 1
          %s458 = smul.addr %s457, 8
          %s459 = scalar_lea.vmem [#allocation7], %s458
          %460 = dma.done %s456, 128
        $region60: #{tpu_custom_call.1} parent=55 // pred_fallthru
          _
        // Predicated region
        $region61: #{tpu_custom_call.1} parent=55 // pred_check
          %p461 = pneg %p163
        $region62: #{tpu_custom_call.1} parent=55 // pred_check_branch
          %463 = sbr.rel (%p461) target = $region64
        $region63: #{tpu_custom_call.1} parent=55 // pred_region
          %s464 = sand.u32 %s28, 1
          %s465 = scalar_lea.sflag [#allocation9], %s464
          %s466 = sand.u32 %s148, 1
          %s467 = smul.addr %s466, 8
          %s468 = scalar_lea.vmem [#allocation8], %s467
          %469 = dma.done %s465, 128
        $region64: #{tpu_custom_call.1} parent=55 // pred_fallthru
          _
        // Predicated region
        $region65: #{tpu_custom_call.1} parent=55 // pred_check
          %p470 = pneg %p191
        $region66: #{tpu_custom_call.1} parent=55 // pred_check_branch
          %472 = sbr.rel (%p470) target = $region68
        $region67: #{tpu_custom_call.1} parent=55 // pred_region
          %s473 = sand.u32 %s28, 1
          %s474 = scalar_lea.sflag [#allocation9], %s473
          %s475 = sand.u32 %s176, 1
          %s476 = smul.addr %s475, 8
          %s477 = scalar_lea.vmem [#allocation10], %s476
          %478 = dma.done %s474, 128
        $region68: #{tpu_custom_call.1} parent=55 // pred_fallthru
          _
      $region56: #{tpu_custom_call.1} parent=5 // pred_fallthru
        _
    $region6: #{tpu_custom_call.1} parent=1 // loop_footer
      %s26 = sadd.s32 1, %s22
    $region7: #{tpu_custom_call.1} parent=1 // loop_footer_branch
      %21 = sbr.rel target = $region3
    $region8: #{tpu_custom_call.1} parent=1 // loop_exit
      _
    %479 = vsyncpa [#allocation3], 1
    %s480 = scalar_lea.sflag [#allocation3], 1
    %481 = vsyncpa %s480, 1
    %482 = vsyncpa [#allocation6], 1
    %483 = vsyncpa [#allocation4], 1
    %s484 = scalar_lea.sflag [#allocation4], 1
    %485 = vsyncpa %s484, 1
    %486 = vsyncpa [#allocation9], 1
    %s487 = scalar_lea.sflag [#allocation9], 1
    %488 = vsyncpa %s487, 1

</llo_original>
